<compile_context>
chip_gen: v7x
topology: tpu7x:2x2x1
jax: 0.10.0
libtpu: 0.0.40
codegen_flags: <defaults>
</compile_context>

<pallas_src>
import functools

import jax
import jax.numpy as jnp
from jax.experimental import pallas as pl
from jax.experimental.pallas import tpu as pltpu

LANE = 128  # f32/bf16 lane width


def _round_up(x, m):
    return (x + m - 1) // m * m


def _res_lstm_kernel(*refs, Ip, Hp, gw, residual_identity):
    """One (hidden-group, batch-tile) block of the fused ResLSTM cell."""
    if residual_identity:
        (x_ref, hx_ref, cx_ref, w_ifo_ref, w_cell_ref,
         b_ifo_ref, b_cell_ref, hy_ref, cy_ref) = refs
        w_res_ref = None
    else:
        (x_ref, hx_ref, cx_ref, w_ifo_ref, w_cell_ref, w_res_ref,
         b_ifo_ref, b_cell_ref, hy_ref, cy_ref) = refs

    t = pl.program_id(0)
    off = pl.multiple_of(t * gw, LANE)      # hidden-column offset of this group

    x = x_ref[...]                          # (bb, Ip)  compute dtype
    hx = hx_ref[...]                        # (bb, Hp)
    cx = cx_ref[...]                        # (bb, Hp)

    # i/f/o gates: three accumulating MXU dots on static, sublane-aligned row
    # slices of the dense ifo weight slab (no concat([x,hx,cx]) temp).
    gates = jnp.dot(x, w_ifo_ref[0:Ip, :], preferred_element_type=jnp.float32)
    gates = gates + jnp.dot(hx, w_ifo_ref[Ip:Ip + Hp, :],
                            preferred_element_type=jnp.float32)
    gates = gates + jnp.dot(cx, w_ifo_ref[Ip + Hp:Ip + 2 * Hp, :],
                            preferred_element_type=jnp.float32)
    gates = gates + b_ifo_ref[...]          # (bb, 3*gw) f32

    # Cell gate uses hx only (dense slab, no zero rows/cols beyond padding).
    cell_pre = (jnp.dot(hx, w_cell_ref[...], preferred_element_type=jnp.float32)
                + b_cell_ref[...])          # (bb, gw) f32

    ingate     = jax.nn.sigmoid(gates[:, 0 * gw:1 * gw])
    forgetgate = jax.nn.sigmoid(gates[:, 1 * gw:2 * gw])
    outgate    = jax.nn.sigmoid(gates[:, 2 * gw:3 * gw])
    cellgate   = jnp.tanh(cell_pre)

    cx_t = cx_ref[:, pl.ds(off, gw)].astype(jnp.float32)
    cy = forgetgate * cx_t + ingate * cellgate
    ry = jnp.tanh(cy)

    if residual_identity:
        # input_size == hidden_size: residual is the raw input (this group).
        resid = x_ref[:, pl.ds(off, gw)].astype(jnp.float32)
    else:
        resid = jnp.dot(x, w_res_ref[...], preferred_element_type=jnp.float32)

    hy = outgate * (ry + resid)

    hy_ref[...] = hy.astype(hy_ref.dtype)   # lane-dense (bb, gw) store
    cy_ref[...] = cy.astype(cy_ref.dtype)


def fuse_res_lstm_params(params, input_size, hidden_size,
                         weight_dtype=jnp.bfloat16, group_max=None,
                         weight_vmem_budget_bytes=20 << 20):
    """One-time (per layer) parameter fusion.  Cache the result; do NOT call
    this per timestep.  weight_dtype=bfloat16 (default) halves weight HBM
    traffic; pass jnp.float32 for bit-tight validation."""
    I, H = input_size, hidden_size
    Ip = _round_up(I, LANE)
    Hp = _round_up(H, LANE)
    num_h_tiles = Hp // LANE
    residual_identity = (I == H)
    if residual_identity:
        # The kernel reads x columns at hidden offsets for the residual.
        assert Ip == Hp, "identity residual requires padded input == padded hidden"
    K_ifo = Ip + 2 * Hp
    wbytes = jnp.dtype(weight_dtype).itemsize

    # Hidden-tile grouping: process g consecutive 128-wide tiles per grid step,
    # capped so the double-buffered weight block stays within a VMEM budget
    # (keeps pipelining alive on v7x's 64 MiB VMEM).
    if group_max is None:
        group_max = 4 if wbytes <= 2 else 2
    g = 1
    for cand in range(min(group_max, num_h_tiles), 0, -1):
        if num_h_tiles % cand:
            continue
        gw_c = cand * LANE
        wblk = 2 * (K_ifo * 3 * gw_c + Hp * gw_c
                    + (0 if residual_identity else Ip * gw_c)) * wbytes
        if wblk <= weight_vmem_budget_bytes or cand == 1:
            g = cand
            break
    gw = g * LANE
    num_groups = num_h_tiles // g

    f32 = jnp.float32
    w_ii_t = params["weight_ii"].astype(f32).T.reshape(I, 3, H)   # x  -> i/f/o
    w_ih_t = params["weight_ih"].astype(f32).T.reshape(H, 3, H)   # hx -> i/f/o
    w_ic_t = params["weight_ic"].astype(f32).T.reshape(H, 3, H)   # cx -> i/f/o

    # Dense i/f/o slab: rows [x | hx | cx]; columns group-major, then
    # [in | forget | out] (each gw lanes) within a hidden group.
    A = jnp.zeros((K_ifo, 3, Hp), f32)
    A = A.at[:I, :, :H].set(w_ii_t)
    A = A.at[Ip:Ip + H, :, :H].set(w_ih_t)
    A = A.at[Ip + Hp:Ip + Hp + H, :, :H].set(w_ic_t)
    W_ifo = (A.reshape(K_ifo, 3, num_groups, gw)
              .transpose(0, 2, 1, 3)
              .reshape(K_ifo, num_groups * 3 * gw)
              .astype(weight_dtype))

    W_cell = (jnp.zeros((Hp, Hp), f32)
                .at[:H, :H].set(params["weight_hh"].astype(f32).T)
                .astype(weight_dtype))

    if residual_identity:
        W_res = None
    else:
        W_res = (jnp.zeros((Ip, Hp), f32)
                   .at[:I, :H].set(params["weight_ir"].astype(f32).T)
                   .astype(weight_dtype))

    bias_ifo = (params["bias_ii"] + params["bias_ih"] + params["bias_ic"]).astype(f32)
    bA = jnp.zeros((3, Hp), f32).at[:, :H].set(bias_ifo.reshape(3, H))
    b_ifo = (bA.reshape(3, num_groups, gw).transpose(1, 0, 2)
               .reshape(1, num_groups * 3 * gw))
    b_cell = jnp.zeros((1, Hp), f32).at[0, :H].set(params["bias_hh"].astype(f32))

    return dict(W_ifo=W_ifo, W_cell=W_cell, W_res=W_res, b_ifo=b_ifo,
                b_cell=b_cell, input_size=I, hidden_size=H, Ip=Ip, Hp=Hp,
                gw=gw, num_groups=num_groups,
                residual_identity=residual_identity,
                compute_dtype=jnp.dtype(weight_dtype))


def res_lstm_cell(x, hx, cx, fused, *, block_b=256, vmem_limit_bytes=None):
    """Pallas ResLSTMCell forward.  x:(B,I)  hx,cx:(B,H)  ->  (hy, cy):(B,H).

    On v5e, if the gate epilogue shows spills, drop block_b to 128."""
    I, H = fused["input_size"], fused["hidden_size"]
    Ip, Hp = fused["Ip"], fused["Hp"]
    gw = fused["gw"]
    num_groups = fused["num_groups"]
    residual_identity = fused["residual_identity"]
    cdt = fused["compute_dtype"]
    out_dtype = x.dtype
    K_ifo = Ip + 2 * Hp

    B = x.shape[0]
    pack = 16 if jnp.dtype(cdt).itemsize == 2 else 8
    Bp = _round_up(B, pack)
    if Bp <= block_b:
        bb = Bp
    else:
        bb = _round_up(block_b, pack)
        Bp = _round_up(Bp, bb)
    num_b_tiles = Bp // bb

    def _pad_cast(a, rows, cols):
        # Skip the extra HBM->HBM op when already padded & typed (e.g. when the
        # recurrent state is kept in its padded layout between timesteps).
        if a.shape == (rows, cols) and a.dtype == cdt:
            return a
        a = a.astype(cdt)
        pr, pc = rows - a.shape[0], cols - a.shape[1]
        if pr or pc:
            a = jnp.pad(a, ((0, pr), (0, pc)))
        return a

    # TODO(synk): for sequence workloads move the timestep loop inside the
    # kernel (T as an 'arbitrary' grid axis, hx/cx carried in VMEM scratch,
    # input_output_aliases for the state) so W is streamed from HBM once per
    # layer instead of once per step.
    x_p = _pad_cast(x, Bp, Ip)
    hx_p = _pad_cast(hx, Bp, Hp)
    cx_p = _pad_cast(cx, Bp, Hp)

    operands = [x_p, hx_p, cx_p, fused["W_ifo"], fused["W_cell"]]
    in_specs = [
        pl.BlockSpec((bb, Ip), lambda t, b: (b, 0)),          # x
        pl.BlockSpec((bb, Hp), lambda t, b: (b, 0)),          # hx
        pl.BlockSpec((bb, Hp), lambda t, b: (b, 0)),          # cx
        pl.BlockSpec((K_ifo, 3 * gw), lambda t, b: (0, t)),   # W_ifo
        pl.BlockSpec((Hp, gw), lambda t, b: (0, t)),          # W_cell
    ]
    if not residual_identity:
        operands.append(fused["W_res"])
        in_specs.append(pl.BlockSpec((Ip, gw), lambda t, b: (0, t)))  # W_res
    operands += [fused["b_ifo"], fused["b_cell"]]
    in_specs += [
        pl.BlockSpec((1, 3 * gw), lambda t, b: (0, t)),       # bias ifo
        pl.BlockSpec((1, gw), lambda t, b: (0, t)),           # bias cell
    ]
    out_specs = (
        pl.BlockSpec((bb, gw), lambda t, b: (b, t)),          # hy
        pl.BlockSpec((bb, gw), lambda t, b: (b, t)),          # cy
    )

    abytes = jnp.dtype(cdt).itemsize
    wbytes = jnp.dtype(fused["W_ifo"].dtype).itemsize
    obytes = jnp.dtype(out_dtype).itemsize

    # Explicit VMEM budget (double-buffered blocks) — the default scoped limit
    # (32 MiB on v7x) can silently shrink pipelining; v7x physical VMEM is
    # 64 MiB, so cap there (safe on v5e/v6e too).
    est = (2 * bb * (Ip + 2 * Hp) * abytes
           + 2 * K_ifo * 3 * gw * wbytes
           + 2 * Hp * gw * wbytes
           + (0 if residual_identity else 2 * Ip * gw * wbytes)
           + 2 * 4 * gw * 4
           + 2 * 2 * bb * gw * obytes)
    if vmem_limit_bytes is None:
        vmem_limit_bytes = min(64 << 20, max(32 << 20, est + (8 << 20)))

    # Megacore: split on hidden groups when possible so each core streams half
    # of W; otherwise let the batch axis be split.
    if num_groups >= 2:
        dims = ("parallel", "arbitrary")
    else:
        dims = ("arbitrary", "parallel")

    flops = 2 * Bp * K_ifo * 3 * Hp + 2 * Bp * Hp * Hp
    if not residual_identity:
        flops += 2 * Bp * Ip * Hp
    w_bytes_total = (fused["W_ifo"].size * wbytes + fused["W_cell"].size * wbytes
                     + fused["b_ifo"].size * 4 + fused["b_cell"].size * 4)
    if not residual_identity:
        w_bytes_total += fused["W_res"].size * wbytes
    bytes_accessed = (w_bytes_total
                      + num_groups * (x_p.size + hx_p.size + cx_p.size) * abytes
                      + 2 * Bp * Hp * obytes)

    kernel = functools.partial(_res_lstm_kernel, Ip=Ip, Hp=Hp, gw=gw,
                               residual_identity=residual_identity)

    hy_p, cy_p = pl.pallas_call(
        kernel,
        out_shape=(jax.ShapeDtypeStruct((Bp, Hp), out_dtype),
                   jax.ShapeDtypeStruct((Bp, Hp), out_dtype)),
        grid_spec=pltpu.PrefetchScalarGridSpec(
            num_scalar_prefetch=0,
            # hidden groups outer, batch tiles inner -> each weight slab is
            # DMAed once per hidden group (constant over the inner batch sweep)
            grid=(num_groups, num_b_tiles),
            in_specs=in_specs,
            out_specs=out_specs),
        compiler_params=pltpu.CompilerParams(
            dimension_semantics=dims,
            vmem_limit_bytes=int(vmem_limit_bytes)),
        cost_estimate=pl.CostEstimate(
            flops=int(flops),
            transcendentals=int(5 * Bp * Hp),
            bytes_accessed=int(bytes_accessed)),
    )(*operands)

    if (Bp, Hp) != (B, H):
        return hy_p[:B, :H], cy_p[:B, :H]
    return hy_p, cy_p


def res_lstm_cell_ref(x, hx, cx, p):
    """Pure-JAX reference mirroring the PyTorch forward exactly."""
    ifo = (x @ p["weight_ii"].T + p["bias_ii"]
           + hx @ p["weight_ih"].T + p["bias_ih"]
           + cx @ p["weight_ic"].T + p["bias_ic"])
    H = hx.shape[1]
    ingate, forgetgate, outgate = ifo[:, :H], ifo[:, H:2 * H], ifo[:, 2 * H:]
    cellgate = jnp.tanh(hx @ p["weight_hh"].T + p["bias_hh"])
    ingate = jax.nn.sigmoid(ingate)
    forgetgate = jax.nn.sigmoid(forgetgate)
    outgate = jax.nn.sigmoid(outgate)
    cy = forgetgate * cx + ingate * cellgate
    ry = jnp.tanh(cy)
    if x.shape[1] == H:
        hy = outgate * (ry + x)
    else:
        hy = outgate * (ry + x @ p["weight_ir"].T)
    return hy, cy


def _make_params(key, input_size, hidden_size):
    ks = jax.random.split(key, 9)
    return {
        "weight_ii": jax.random.normal(ks[0], (3 * hidden_size, input_size), jnp.float32),
        "weight_ic": jax.random.normal(ks[1], (3 * hidden_size, hidden_size), jnp.float32),
        "weight_ih": jax.random.normal(ks[2], (3 * hidden_size, hidden_size), jnp.float32),
        "bias_ii":   jax.random.normal(ks[3], (3 * hidden_size,), jnp.float32),
        "bias_ic":   jax.random.normal(ks[4], (3 * hidden_size,), jnp.float32),
        "bias_ih":   jax.random.normal(ks[5], (3 * hidden_size,), jnp.float32),
        "weight_hh": jax.random.normal(ks[6], (hidden_size, hidden_size), jnp.float32),
        "bias_hh":   jax.random.normal(ks[7], (hidden_size,), jnp.float32),
        "weight_ir": jax.random.normal(ks[8], (hidden_size, input_size), jnp.float32),
    }


if __name__ == "__main__":
    configs = [
        # (name, B, input_size, hidden_size)
        ("projected_residual", 8, 16, 32),   # I != H -> uses weight_ir slab
        ("identity_residual",  8, 32, 32),   # I == H -> residual is raw input
    ]

    for name, B, input_size, hidden_size in configs:
        key = jax.random.PRNGKey(0)
        kp, kx, kh, kc = jax.random.split(key, 4)
        params = _make_params(kp, input_size, hidden_size)

        x = jax.random.normal(kx, (B, input_size), jnp.float32)
        hx = jax.random.normal(kh, (B, hidden_size), jnp.float32)
        cx = jax.random.normal(kc, (B, hidden_size), jnp.float32)

        # ---- f32 weights: tight check against the PyTorch-equivalent ref ----
        fused32 = fuse_res_lstm_params(params, input_size, hidden_size,
                                       weight_dtype=jnp.float32)
        hy, cy = res_lstm_cell(x, hx, cx, fused32)
        jax.block_until_ready((hy, cy))
        hy_ref, cy_ref = res_lstm_cell_ref(x, hx, cx, params)
        assert hy.shape == (B, hidden_size) and cy.shape == (B, hidden_size)
        assert jnp.allclose(hy, hy_ref, atol=2e-4, rtol=2e-4), f"{name}: hy (f32)"
        assert jnp.allclose(cy, cy_ref, atol=2e-4, rtol=2e-4), f"{name}: cy (f32)"

        # ---- bf16 weights (default): compare against an identically
        #      quantized reference (weights/activations -> bf16, bias f32) ----
        fused_bf = fuse_res_lstm_params(params, input_size, hidden_size,
                                        weight_dtype=jnp.bfloat16)
        hy_b, cy_b = res_lstm_cell(x, hx, cx, fused_bf)
        jax.block_until_ready((hy_b, cy_b))

        def q(a):
            return a.astype(jnp.bfloat16).astype(jnp.float32)

        params_q = {k: (q(v) if k.startswith("weight") else v)
                    for k, v in params.items()}
        hy_rq, cy_rq = res_lstm_cell_ref(q(x), q(hx), q(cx), params_q)
        assert jnp.allclose(hy_b, hy_rq, atol=2e-2, rtol=2e-2), f"{name}: hy (bf16)"
        assert jnp.allclose(cy_b, cy_rq, atol=2e-2, rtol=2e-2), f"{name}: cy (bf16)"

    print("KERNEL_OK")
</pallas_src>

<mosaic_0001>
module attributes {stable_mosaic.version = 11 : i64} {
  func.func @_res_lstm_kernel(%arg0: i32, %arg1: i32, %arg2: memref<8x128xf32, #tpu.memory_space<vmem>>, %arg3: memref<8x128xf32, #tpu.memory_space<vmem>>, %arg4: memref<8x128xf32, #tpu.memory_space<vmem>>, %arg5: memref<384x384xf32, #tpu.memory_space<vmem>>, %arg6: memref<128x128xf32, #tpu.memory_space<vmem>>, %arg7: memref<128x128xf32, #tpu.memory_space<vmem>>, %arg8: memref<1x384xf32, #tpu.memory_space<vmem>>, %arg9: memref<1x128xf32, #tpu.memory_space<vmem>>, %arg10: memref<8x128xf32, #tpu.memory_space<vmem>>, %arg11: memref<8x128xf32, #tpu.memory_space<vmem>>) attributes {dimension_semantics = [#tpu.dimension_semantics<arbitrary>, #tpu.dimension_semantics<parallel>], iteration_bounds = array<i64: 1, 1>, scalar_prefetch = 0 : i64, scratch_operands = 0 : i64, tpu.core_type = #tpu.core_type<tc>, window_params = [{transform_indices = @transform_0, window_bounds = array<i64: 8, 128>}, {transform_indices = @transform_1, window_bounds = array<i64: 8, 128>}, {transform_indices = @transform_2, window_bounds = array<i64: 8, 128>}, {transform_indices = @transform_3, window_bounds = array<i64: 384, 384>}, {transform_indices = @transform_4, window_bounds = array<i64: 128, 128>}, {transform_indices = @transform_5, window_bounds = array<i64: 128, 128>}, {transform_indices = @transform_6, window_bounds = array<i64: 1, 384>}, {transform_indices = @transform_7, window_bounds = array<i64: 1, 128>}, {transform_indices = @transform_8, window_bounds = array<i64: 8, 128>}, {transform_indices = @transform_9, window_bounds = array<i64: 8, 128>}]} {
    %c128_i32 = arith.constant 128 : i32
    %0 = arith.muli %arg0, %c128_i32 : i32
    %1 = tpu.assume_multiple %0, 128 : i32
    %c0 = arith.constant 0 : index
    %c0_0 = arith.constant 0 : index
    %2 = vector.load %arg2[%c0, %c0_0] : memref<8x128xf32, #tpu.memory_space<vmem>>, vector<8x128xf32>
    %c0_1 = arith.constant 0 : index
    %c0_2 = arith.constant 0 : index
    %3 = vector.load %arg3[%c0_1, %c0_2] : memref<8x128xf32, #tpu.memory_space<vmem>>, vector<8x128xf32>
    %c0_3 = arith.constant 0 : index
    %c0_4 = arith.constant 0 : index
    %4 = vector.load %arg4[%c0_3, %c0_4] : memref<8x128xf32, #tpu.memory_space<vmem>>, vector<8x128xf32>
    %c0_5 = arith.constant 0 : index
    %c0_6 = arith.constant 0 : index
    %5 = vector.load %arg5[%c0_5, %c0_6] : memref<384x384xf32, #tpu.memory_space<vmem>>, vector<128x384xf32>
    %cst = arith.constant dense<0.000000e+00> : vector<8x384xf32>
    %6 = tpu.matmul %2, %5, %cst {dimension_numbers = #tpu.dot_dimension_numbers<[1], [0], [0], [1], [0, 0, 1, 1], [], []>} : vector<8x128xf32>, vector<128x384xf32>, vector<8x384xf32> -> vector<8x384xf32>
    %c128 = arith.constant 128 : index
    %c0_7 = arith.constant 0 : index
    %7 = vector.load %arg5[%c128, %c0_7] : memref<384x384xf32, #tpu.memory_space<vmem>>, vector<128x384xf32>
    %cst_8 = arith.constant dense<0.000000e+00> : vector<8x384xf32>
    %8 = tpu.matmul %3, %7, %cst_8 {dimension_numbers = #tpu.dot_dimension_numbers<[1], [0], [0], [1], [0, 0, 1, 1], [], []>} : vector<8x128xf32>, vector<128x384xf32>, vector<8x384xf32> -> vector<8x384xf32>
    %9 = arith.addf %6, %8 : vector<8x384xf32>
    %c256 = arith.constant 256 : index
    %c0_9 = arith.constant 0 : index
    %10 = vector.load %arg5[%c256, %c0_9] : memref<384x384xf32, #tpu.memory_space<vmem>>, vector<128x384xf32>
    %cst_10 = arith.constant dense<0.000000e+00> : vector<8x384xf32>
    %11 = tpu.matmul %4, %10, %cst_10 {dimension_numbers = #tpu.dot_dimension_numbers<[1], [0], [0], [1], [0, 0, 1, 1], [], []>} : vector<8x128xf32>, vector<128x384xf32>, vector<8x384xf32> -> vector<8x384xf32>
    %12 = arith.addf %9, %11 : vector<8x384xf32>
    %c0_11 = arith.constant 0 : index
    %c0_12 = arith.constant 0 : index
    %13 = vector.load %arg8[%c0_11, %c0_12] : memref<1x384xf32, #tpu.memory_space<vmem>>, vector<1x384xf32>
    %14 = vector.broadcast %13 : vector<1x384xf32> to vector<8x384xf32>
    %15 = arith.addf %12, %14 : vector<8x384xf32>
    %c0_13 = arith.constant 0 : index
    %c0_14 = arith.constant 0 : index
    %16 = vector.load %arg6[%c0_13, %c0_14] : memref<128x128xf32, #tpu.memory_space<vmem>>, vector<128x128xf32>
    %cst_15 = arith.constant dense<0.000000e+00> : vector<8x128xf32>
    %17 = tpu.matmul %3, %16, %cst_15 {dimension_numbers = #tpu.dot_dimension_numbers<[1], [0], [0], [1], [0, 0, 1, 1], [], []>} : vector<8x128xf32>, vector<128x128xf32>, vector<8x128xf32> -> vector<8x128xf32>
    %c0_16 = arith.constant 0 : index
    %c0_17 = arith.constant 0 : index
    %18 = vector.load %arg9[%c0_16, %c0_17] : memref<1x128xf32, #tpu.memory_space<vmem>>, vector<1x128xf32>
    %19 = vector.broadcast %18 : vector<1x128xf32> to vector<8x128xf32>
    %20 = arith.addf %17, %19 : vector<8x128xf32>
    %21 = vector.extract_strided_slice %15 {offsets = [0, 0], sizes = [8, 128], strides = [1, 1]} : vector<8x384xf32> to vector<8x128xf32>
    %22 = arith.negf %21 : vector<8x128xf32>
    %23 = math.exp %22 : vector<8x128xf32>
    %cst_18 = arith.constant 1.000000e+00 : f32
    %24 = vector.broadcast %cst_18 : f32 to vector<8x128xf32>
    %25 = arith.addf %24, %23 : vector<8x128xf32>
    %26 = arith.divf %24, %25 : vector<8x128xf32>
    %27 = vector.extract_strided_slice %15 {offsets = [0, 128], sizes = [8, 128], strides = [1, 1]} : vector<8x384xf32> to vector<8x128xf32>
    %28 = arith.negf %27 : vector<8x128xf32>
    %29 = math.exp %28 : vector<8x128xf32>
    %cst_19 = arith.constant 1.000000e+00 : f32
    %30 = vector.broadcast %cst_19 : f32 to vector<8x128xf32>
    %31 = arith.addf %30, %29 : vector<8x128xf32>
    %32 = arith.divf %30, %31 : vector<8x128xf32>
    %33 = vector.extract_strided_slice %15 {offsets = [0, 256], sizes = [8, 128], strides = [1, 1]} : vector<8x384xf32> to vector<8x128xf32>
    %34 = arith.negf %33 : vector<8x128xf32>
    %35 = math.exp %34 : vector<8x128xf32>
    %cst_20 = arith.constant 1.000000e+00 : f32
    %36 = vector.broadcast %cst_20 : f32 to vector<8x128xf32>
    %37 = arith.addf %36, %35 : vector<8x128xf32>
    %38 = arith.divf %36, %37 : vector<8x128xf32>
    %39 = math.tanh %20 : vector<8x128xf32>
    %c0_21 = arith.constant 0 : index
    %40 = arith.index_cast %1 : i32 to index
    %41 = vector.load %arg4[%c0_21, %40] : memref<8x128xf32, #tpu.memory_space<vmem>>, vector<8x128xf32>
    %42 = arith.mulf %32, %41 : vector<8x128xf32>
    %43 = arith.mulf %26, %39 : vector<8x128xf32>
    %44 = arith.addf %42, %43 : vector<8x128xf32>
    %45 = math.tanh %44 : vector<8x128xf32>
    %c0_22 = arith.constant 0 : index
    %c0_23 = arith.constant 0 : index
    %46 = vector.load %arg7[%c0_22, %c0_23] : memref<128x128xf32, #tpu.memory_space<vmem>>, vector<128x128xf32>
    %cst_24 = arith.constant dense<0.000000e+00> : vector<8x128xf32>
    %47 = tpu.matmul %2, %46, %cst_24 {dimension_numbers = #tpu.dot_dimension_numbers<[1], [0], [0], [1], [0, 0, 1, 1], [], []>} : vector<8x128xf32>, vector<128x128xf32>, vector<8x128xf32> -> vector<8x128xf32>
    %48 = arith.addf %45, %47 : vector<8x128xf32>
    %49 = arith.mulf %38, %48 : vector<8x128xf32>
    %c0_25 = arith.constant 0 : index
    %c0_26 = arith.constant 0 : index
    %50 = vector.load %arg10[%c0_25, %c0_26] : memref<8x128xf32, #tpu.memory_space<vmem>>, vector<8x128xf32>
    tpu.vector_store %arg10[%c0_25, %c0_26], %49 {strides = array<i32>} : memref<8x128xf32, #tpu.memory_space<vmem>>, vector<8x128xf32>,
    %c0_27 = arith.constant 0 : index
    %c0_28 = arith.constant 0 : index
    %51 = vector.load %arg11[%c0_27, %c0_28] : memref<8x128xf32, #tpu.memory_space<vmem>>, vector<8x128xf32>
    tpu.vector_store %arg11[%c0_27, %c0_28], %44 {strides = array<i32>} : memref<8x128xf32, #tpu.memory_space<vmem>>, vector<8x128xf32>,
    return
  }
  func.func @transform_0(%arg0: i32, %arg1: i32) -> (i32, i32) {
    %c0_i32 = arith.constant 0 : i32
    %c0_i32_0 = arith.constant 0 : i32
    return %arg1, %c0_i32 : i32, i32
  }
  func.func @transform_1(%arg0: i32, %arg1: i32) -> (i32, i32) {
    %c0_i32 = arith.constant 0 : i32
    %c0_i32_0 = arith.constant 0 : i32
    return %arg1, %c0_i32 : i32, i32
  }
  func.func @transform_2(%arg0: i32, %arg1: i32) -> (i32, i32) {
    %c0_i32 = arith.constant 0 : i32
    %c0_i32_0 = arith.constant 0 : i32
    return %arg1, %c0_i32 : i32, i32
  }
  func.func @transform_3(%arg0: i32, %arg1: i32) -> (i32, i32) {
    %c0_i32 = arith.constant 0 : i32
    %c0_i32_0 = arith.constant 0 : i32
    return %c0_i32, %arg0 : i32, i32
  }
  func.func @transform_4(%arg0: i32, %arg1: i32) -> (i32, i32) {
    %c0_i32 = arith.constant 0 : i32
    %c0_i32_0 = arith.constant 0 : i32
    return %c0_i32, %arg0 : i32, i32
  }
  func.func @transform_5(%arg0: i32, %arg1: i32) -> (i32, i32) {
    %c0_i32 = arith.constant 0 : i32
    %c0_i32_0 = arith.constant 0 : i32
    return %c0_i32, %arg0 : i32, i32
  }
  func.func @transform_6(%arg0: i32, %arg1: i32) -> (i32, i32) {
    %c0_i32 = arith.constant 0 : i32
    %c0_i32_0 = arith.constant 0 : i32
    return %c0_i32, %arg0 : i32, i32
  }
  func.func @transform_7(%arg0: i32, %arg1: i32) -> (i32, i32) {
    %c0_i32 = arith.constant 0 : i32
    %c0_i32_0 = arith.constant 0 : i32
    return %c0_i32, %arg0 : i32, i32
  }
  func.func @transform_8(%arg0: i32, %arg1: i32) -> (i32, i32) {
    %c0_i32 = arith.constant 0 : i32
    return %arg1, %arg0 : i32, i32
  }
  func.func @transform_9(%arg0: i32, %arg1: i32) -> (i32, i32) {
    %c0_i32 = arith.constant 0 : i32
    return %arg1, %arg0 : i32, i32
  }
}

</mosaic_0001>

<llo_original>
// kernel: tpu_custom_call.1
$region0: #{tpu_custom_call.1}
  #allocation0 [shape = 'u32[]', space=smem, size = 0x4, offset = 0x4, fixed_abs, tag = 'smem constant byte address 0x4 - core index']
  #allocation1 [shape = 'u32[144,128]{1,0:T(1,128)}', space=vmem, size = 0x12000, scoped, tag = 'internal scratch']
  %s0 = inlined_call_operand.hbm [shape: f32[8,128], index: 0, kind: input, shape index: {}]
  %s1 = inlined_call_operand.hbm [shape: f32[8,128], index: 1, kind: input, shape index: {}]
  %s2 = inlined_call_operand.hbm [shape: f32[8,128], index: 2, kind: input, shape index: {}]
  %s3 = inlined_call_operand.hbm [shape: f32[384,384], index: 3, kind: input, shape index: {}]
  %s4 = inlined_call_operand.hbm [shape: f32[128,128], index: 4, kind: input, shape index: {}]
  %s5 = inlined_call_operand.hbm [shape: f32[128,128], index: 5, kind: input, shape index: {}]
  %s6 = inlined_call_operand.vmem [shape: f32[1,384], index: 6, kind: input, shape index: {}]
  %s7 = inlined_call_operand.vmem [shape: f32[1,128], index: 7, kind: input, shape index: {}]
  %s8 = inlined_call_operand.hbm [shape: f32[8,128], index: 8, kind: output, shape index: {0}]
  %s9 = inlined_call_operand.hbm [shape: f32[8,128], index: 9, kind: output, shape index: {1}]
  %10 = xla_tuple %s8, %s9
  %s11 = sld [smem:[#allocation0]]
  $region74: #{tpu_custom_call.1} parent=0
    _
  %s13 = ssub.s32 1, %s11
  %s14 = scalar_select 0, %s13, %s11
  $region1: #{tpu_custom_call.1} parent=0
    #allocation2 [shape = 'u8[4096]{0}', space=vmem, size = 0x1000, scoped, tag = 'input window, operand 0, single buffered']
    #allocation3 [shape = 's32[1]{0}', space=sflag, size = 0x4, scoped, tag = 'scoped memory for tpu_custom_call.1']
    #allocation4 [shape = 's32[1]{0}', space=sflag, size = 0x4, scoped, tag = 'scoped memory for tpu_custom_call.1']
    #allocation5 [shape = 'u8[4096]{0}', space=vmem, size = 0x1000, scoped, tag = 'input window, operand 1, single buffered']
    #allocation6 [shape = 's32[1]{0}', space=sflag, size = 0x4, scoped, tag = 'scoped memory for tpu_custom_call.1']
    #allocation7 [shape = 'u8[4096]{0}', space=vmem, size = 0x1000, scoped, tag = 'input window, operand 2, single buffered']
    #allocation8 [shape = 'u8[589824]{0}', space=vmem, size = 0x90000, scoped, tag = 'input window, operand 3, single buffered']
    #allocation9 [shape = 's32[1]{0}', space=sflag, size = 0x4, scoped, tag = 'scoped memory for tpu_custom_call.1']
    #allocation10 [shape = 'u8[65536]{0}', space=vmem, size = 0x10000, scoped, tag = 'input window, operand 4, single buffered']
    #allocation11 [shape = 'u8[65536]{0}', space=vmem, size = 0x10000, scoped, tag = 'input window, operand 5, single buffered']
    #allocation12 [shape = 's32[1]{0}', space=sflag, size = 0x4, scoped, tag = 'scoped memory for tpu_custom_call.1']
    #allocation13 [shape = 'u8[4096]{0}', space=vmem, size = 0x1000, scoped, tag = 'output window, operand 0, single buffered']
    #allocation14 [shape = 'u8[4096]{0}', space=vmem, size = 0x1000, scoped, tag = 'output window, operand 1, single buffered']
    #allocation15 [shape = 's32[1]{0}', space=sflag, size = 0x4, scoped, tag = 'scoped memory for tpu_custom_call.1']
    %15 = vsyncpa [#allocation3], 0
    %16 = vsyncpa [#allocation6], 0
    %17 = vsyncpa [#allocation9], 0
    %18 = vsyncpa [#allocation12], 0
    %19 = vsyncpa [#allocation4], 0
    %20 = vsyncpa [#allocation15], 0
    // Predicated region
    $region2: #{tpu_custom_call.1} parent=1 // pred_check
      _
    $region3: #{tpu_custom_call.1} parent=1 // pred_check_branch
      %22 = sbr.rel (0) target = $region5
    $region4: #{tpu_custom_call.1} parent=1 // pred_region
      %s24 = ssub.s32 128, 128
      %25 = vsyncadd [#allocation3], %s24
      %s27 = sshll.u32 [#allocation2], 4
      %s28 = int_to_ptr.vmem [resolvable:$true] %s27
      %30 = dma.hbm_to_vmem [thread:$0]  %s0, 128, %s28, [#allocation3]
    $region5: #{tpu_custom_call.1} parent=1 // pred_fallthru
      _
    // Predicated region
    $region6: #{tpu_custom_call.1} parent=1 // pred_check
      _
    $region7: #{tpu_custom_call.1} parent=1 // pred_check_branch
      %32 = sbr.rel (0) target = $region9
    $region8: #{tpu_custom_call.1} parent=1 // pred_region
      %s34 = ssub.s32 128, 128
      %35 = vsyncadd [#allocation6], %s34
      %s37 = sshll.u32 [#allocation5], 4
      %s38 = int_to_ptr.vmem [resolvable:$true] %s37
      %40 = dma.hbm_to_vmem [thread:$0]  %s1, 128, %s38, [#allocation6]
    $region9: #{tpu_custom_call.1} parent=1 // pred_fallthru
      _
    // Predicated region
    $region10: #{tpu_custom_call.1} parent=1 // pred_check
      _
    $region11: #{tpu_custom_call.1} parent=1 // pred_check_branch
      %42 = sbr.rel (0) target = $region13
    $region12: #{tpu_custom_call.1} parent=1 // pred_region
      %s44 = ssub.s32 128, 128
      %45 = vsyncadd [#allocation6], %s44
      %s47 = sshll.u32 [#allocation7], 4
      %s48 = int_to_ptr.vmem [resolvable:$true] %s47
      %50 = dma.hbm_to_vmem [thread:$0]  %s2, 128, %s48, [#allocation6]
    $region13: #{tpu_custom_call.1} parent=1 // pred_fallthru
      _
    // Predicated region
    $region14: #{tpu_custom_call.1} parent=1 // pred_check
      _
    $region15: #{tpu_custom_call.1} parent=1 // pred_check_branch
      %52 = sbr.rel (0) target = $region17
    $region16: #{tpu_custom_call.1} parent=1 // pred_region
      %s54 = ssub.s32 18432, 18432
      %55 = vsyncadd [#allocation9], %s54
      %s56 = sshll.u32 [#allocation8], 4
      %s57 = int_to_ptr.vmem [resolvable:$true] %s56
      %62 = dma.hbm_to_vmem [thread:$0]  %s3, 18432, %s57, [#allocation9], 384, 384, 24
    $region17: #{tpu_custom_call.1} parent=1 // pred_fallthru
      _
    // Predicated region
    $region18: #{tpu_custom_call.1} parent=1 // pred_check
      _
    $region19: #{tpu_custom_call.1} parent=1 // pred_check_branch
      %64 = sbr.rel (0) target = $region21
    $region20: #{tpu_custom_call.1} parent=1 // pred_region
      %s66 = ssub.s32 2048, 2048
      %67 = vsyncadd [#allocation9], %s66
      %s68 = sshll.u32 [#allocation10], 4
      %s69 = int_to_ptr.vmem [resolvable:$true] %s68
      %74 = dma.hbm_to_vmem [thread:$0]  %s4, 2048, %s69, [#allocation9], 128, 128, 8
    $region21: #{tpu_custom_call.1} parent=1 // pred_fallthru
      _
    // Predicated region
    $region22: #{tpu_custom_call.1} parent=1 // pred_check
      _
    $region23: #{tpu_custom_call.1} parent=1 // pred_check_branch
      %76 = sbr.rel (0) target = $region25
    $region24: #{tpu_custom_call.1} parent=1 // pred_region
      %s78 = ssub.s32 2048, 2048
      %79 = vsyncadd [#allocation12], %s78
      %s80 = sshll.u32 [#allocation11], 4
      %s81 = int_to_ptr.vmem [resolvable:$true] %s80
      %86 = dma.hbm_to_vmem [thread:$0]  %s5, 2048, %s81, [#allocation12], 128, 128, 8
    $region25: #{tpu_custom_call.1} parent=1 // pred_fallthru
      _
    // Predicated region
    $region26: #{tpu_custom_call.1} parent=1 // pred_check
      _
    $region27: #{tpu_custom_call.1} parent=1 // pred_check_branch
      %88 = sbr.rel (0) target = $region29
    $region28: #{tpu_custom_call.1} parent=1 // pred_region
      _
    $region29: #{tpu_custom_call.1} parent=1 // pred_fallthru
      _
    // Predicated region
    $region30: #{tpu_custom_call.1} parent=1 // pred_check
      _
    $region31: #{tpu_custom_call.1} parent=1 // pred_check_branch
      %90 = sbr.rel (0) target = $region33
    $region32: #{tpu_custom_call.1} parent=1 // pred_region
      _
    $region33: #{tpu_custom_call.1} parent=1 // pred_fallthru
      _
    // Predicated region
    $region34: #{tpu_custom_call.1} parent=1 // pred_check
      _
    $region35: #{tpu_custom_call.1} parent=1 // pred_check_branch
      %92 = sbr.rel (0) target = $region37
    $region36: #{tpu_custom_call.1} parent=1 // pred_region
      %93 = dma.done [#allocation3], 128
    $region37: #{tpu_custom_call.1} parent=1 // pred_fallthru
      _
    // Predicated region
    $region38: #{tpu_custom_call.1} parent=1 // pred_check
      _
    $region39: #{tpu_custom_call.1} parent=1 // pred_check_branch
      %95 = sbr.rel (0) target = $region41
    $region40: #{tpu_custom_call.1} parent=1 // pred_region
      %96 = dma.done [#allocation6], 128
    $region41: #{tpu_custom_call.1} parent=1 // pred_fallthru
      _
    // Predicated region
    $region42: #{tpu_custom_call.1} parent=1 // pred_check
      _
    $region43: #{tpu_custom_call.1} parent=1 // pred_check_branch
      %98 = sbr.rel (0) target = $region45
    $region44: #{tpu_custom_call.1} parent=1 // pred_region
      %99 = dma.done [#allocation6], 128
    $region45: #{tpu_custom_call.1} parent=1 // pred_fallthru
      _
    // Predicated region
    $region46: #{tpu_custom_call.1} parent=1 // pred_check
      _
    $region47: #{tpu_custom_call.1} parent=1 // pred_check_branch
      %101 = sbr.rel (0) target = $region49
    $region48: #{tpu_custom_call.1} parent=1 // pred_region
      %102 = dma.done [#allocation9], 18432
    $region49: #{tpu_custom_call.1} parent=1 // pred_fallthru
      _
    // Predicated region
    $region50: #{tpu_custom_call.1} parent=1 // pred_check
      _
    $region51: #{tpu_custom_call.1} parent=1 // pred_check_branch
      %104 = sbr.rel (0) target = $region53
    $region52: #{tpu_custom_call.1} parent=1 // pred_region
      %105 = dma.done [#allocation9], 2048
    $region53: #{tpu_custom_call.1} parent=1 // pred_fallthru
      _
    // Predicated region
    $region54: #{tpu_custom_call.1} parent=1 // pred_check
      _
    $region55: #{tpu_custom_call.1} parent=1 // pred_check_branch
      %107 = sbr.rel (0) target = $region57
    $region56: #{tpu_custom_call.1} parent=1 // pred_region
      %108 = dma.done [#allocation12], 2048
    $region57: #{tpu_custom_call.1} parent=1 // pred_fallthru
      _
    %s109 = smul.u32 0, 128
    %v110 = vld [vmem:[#allocation2] sm:$0xff]
    %v111 = vld [vmem:[#allocation5] sm:$0xff]
    %v112 = vld [vmem:[#allocation7] sm:$0xff]
    %v113 = vld [vmem:[#allocation8] sm:$0xff]
    %v114 = vld [vmem:[#allocation8 + $0x8] sm:$0xff]
    %v115 = vld [vmem:[#allocation8 + $0x10] sm:$0xff]
    %v116 = vld [vmem:[#allocation8 + $0x18] sm:$0xff]
    %v117 = vld [vmem:[#allocation8 + $0x20] sm:$0xff]
    %v118 = vld [vmem:[#allocation8 + $0x28] sm:$0xff]
    %v119 = vld [vmem:[#allocation8 + $0x30] sm:$0xff]
    %v120 = vld [vmem:[#allocation8 + $0x38] sm:$0xff]
    %v121 = vld [vmem:[#allocation8 + $0x40] sm:$0xff]
    %v122 = vld [vmem:[#allocation8 + $0x48] sm:$0xff]
    %v123 = vld [vmem:[#allocation8 + $0x50] sm:$0xff]
    %v124 = vld [vmem:[#allocation8 + $0x58] sm:$0xff]
    %v125 = vld [vmem:[#allocation8 + $0x60] sm:$0xff]
    %v126 = vld [vmem:[#allocation8 + $0x68] sm:$0xff]
    %v127 = vld [vmem:[#allocation8 + $0x70] sm:$0xff]
    %v128 = vld [vmem:[#allocation8 + $0x78] sm:$0xff]
    %v129 = vld [vmem:[#allocation8 + $0x80] sm:$0xff]
    %v130 = vld [vmem:[#allocation8 + $0x88] sm:$0xff]
    %v131 = vld [vmem:[#allocation8 + $0x90] sm:$0xff]
    %v132 = vld [vmem:[#allocation8 + $0x98] sm:$0xff]
    %v133 = vld [vmem:[#allocation8 + $0xa0] sm:$0xff]
    %v134 = vld [vmem:[#allocation8 + $0xa8] sm:$0xff]
    %v135 = vld [vmem:[#allocation8 + $0xb0] sm:$0xff]
    %v136 = vld [vmem:[#allocation8 + $0xb8] sm:$0xff]
    %v137 = vld [vmem:[#allocation8 + $0xc0] sm:$0xff]
    %v138 = vld [vmem:[#allocation8 + $0xc8] sm:$0xff]
    %v139 = vld [vmem:[#allocation8 + $0xd0] sm:$0xff]
    %v140 = vld [vmem:[#allocation8 + $0xd8] sm:$0xff]
    %v141 = vld [vmem:[#allocation8 + $0xe0] sm:$0xff]
    %v142 = vld [vmem:[#allocation8 + $0xe8] sm:$0xff]
    %v143 = vld [vmem:[#allocation8 + $0xf0] sm:$0xff]
    %v144 = vld [vmem:[#allocation8 + $0xf8] sm:$0xff]
    %v145 = vld [vmem:[#allocation8 + $0x100] sm:$0xff]
    %v146 = vld [vmem:[#allocation8 + $0x108] sm:$0xff]
    %v147 = vld [vmem:[#allocation8 + $0x110] sm:$0xff]
    %v148 = vld [vmem:[#allocation8 + $0x118] sm:$0xff]
    %v149 = vld [vmem:[#allocation8 + $0x120] sm:$0xff]
    %v150 = vld [vmem:[#allocation8 + $0x128] sm:$0xff]
    %v151 = vld [vmem:[#allocation8 + $0x130] sm:$0xff]
    %v152 = vld [vmem:[#allocation8 + $0x138] sm:$0xff]
    %v153 = vld [vmem:[#allocation8 + $0x140] sm:$0xff]
    %v154 = vld [vmem:[#allocation8 + $0x148] sm:$0xff]
    %v155 = vld [vmem:[#allocation8 + $0x150] sm:$0xff]
    %v156 = vld [vmem:[#allocation8 + $0x158] sm:$0xff]
    %v157 = vld [vmem:[#allocation8 + $0x160] sm:$0xff]
    %v158 = vld [vmem:[#allocation8 + $0x168] sm:$0xff]
    %v159 = vld [vmem:[#allocation8 + $0x170] sm:$0xff]
    %v160 = vld [vmem:[#allocation8 + $0x178] sm:$0xff]
    %v161 = vld [vmem:[#allocation8 + $0x180] sm:$0xff]
    %v162 = vld [vmem:[#allocation8 + $0x188] sm:$0xff]
    %v163 = vld [vmem:[#allocation8 + $0x190] sm:$0xff]
    %v164 = vld [vmem:[#allocation8 + $0x198] sm:$0xff]
    %v165 = vld [vmem:[#allocation8 + $0x1a0] sm:$0xff]
    %v166 = vld [vmem:[#allocation8 + $0x1a8] sm:$0xff]
    %v167 = vld [vmem:[#allocation8 + $0x1b0] sm:$0xff]
    %v168 = vld [vmem:[#allocation8 + $0x1b8] sm:$0xff]
    %v169 = vld [vmem:[#allocation8 + $0x1c0] sm:$0xff]
    %v170 = vld [vmem:[#allocation8 + $0x1c8] sm:$0xff]
    %v171 = vld [vmem:[#allocation8 + $0x1d0] sm:$0xff]
    %v172 = vld [vmem:[#allocation8 + $0x1d8] sm:$0xff]
    %v173 = vld [vmem:[#allocation8 + $0x1e0] sm:$0xff]
    %v174 = vld [vmem:[#allocation8 + $0x1e8] sm:$0xff]
    %v175 = vld [vmem:[#allocation8 + $0x1f0] sm:$0xff]
    %v176 = vld [vmem:[#allocation8 + $0x1f8] sm:$0xff]
    %v177 = vld [vmem:[#allocation8 + $0x200] sm:$0xff]
    %v178 = vld [vmem:[#allocation8 + $0x208] sm:$0xff]
    %v179 = vld [vmem:[#allocation8 + $0x210] sm:$0xff]
    %v180 = vld [vmem:[#allocation8 + $0x218] sm:$0xff]
    %v181 = vld [vmem:[#allocation8 + $0x220] sm:$0xff]
    %v182 = vld [vmem:[#allocation8 + $0x228] sm:$0xff]
    %v183 = vld [vmem:[#allocation8 + $0x230] sm:$0xff]
    %v184 = vld [vmem:[#allocation8 + $0x238] sm:$0xff]
    %v185 = vld [vmem:[#allocation8 + $0x240] sm:$0xff]
    %v186 = vld [vmem:[#allocation8 + $0x248] sm:$0xff]
    %v187 = vld [vmem:[#allocation8 + $0x250] sm:$0xff]
    %v188 = vld [vmem:[#allocation8 + $0x258] sm:$0xff]
    %v189 = vld [vmem:[#allocation8 + $0x260] sm:$0xff]
    %v190 = vld [vmem:[#allocation8 + $0x268] sm:$0xff]
    %v191 = vld [vmem:[#allocation8 + $0x270] sm:$0xff]
    %v192 = vld [vmem:[#allocation8 + $0x278] sm:$0xff]
    %v193 = vld [vmem:[#allocation8 + $0x280] sm:$0xff]
    %v194 = vld [vmem:[#allocation8 + $0x288] sm:$0xff]
    %v195 = vld [vmem:[#allocation8 + $0x290] sm:$0xff]
    %v196 = vld [vmem:[#allocation8 + $0x298] sm:$0xff]
    %v197 = vld [vmem:[#allocation8 + $0x2a0] sm:$0xff]
    %v198 = vld [vmem:[#allocation8 + $0x2a8] sm:$0xff]
    %v199 = vld [vmem:[#allocation8 + $0x2b0] sm:$0xff]
    %v200 = vld [vmem:[#allocation8 + $0x2b8] sm:$0xff]
    %v201 = vld [vmem:[#allocation8 + $0x2c0] sm:$0xff]
    %v202 = vld [vmem:[#allocation8 + $0x2c8] sm:$0xff]
    %v203 = vld [vmem:[#allocation8 + $0x2d0] sm:$0xff]
    %v204 = vld [vmem:[#allocation8 + $0x2d8] sm:$0xff]
    %v205 = vld [vmem:[#allocation8 + $0x2e0] sm:$0xff]
    %v206 = vld [vmem:[#allocation8 + $0x2e8] sm:$0xff]
    %v207 = vld [vmem:[#allocation8 + $0x2f0] sm:$0xff]
    %v208 = vld [vmem:[#allocation8 + $0x2f8] sm:$0xff]
    %209 = vmatprep.subr.mxu0 %v162
    %210 = vmatpush1.msra.mxu0 %v161
    %211 = vmatprep.subr.mxu0 %v165
    %212 = vmatpush1.msra.mxu0 %v164
    %213 = vmatprep.subr.mxu0 %v168
    %214 = vmatpush1.msra.mxu0 %v167
    %215 = vmatprep.subr.mxu0 %v171
    %216 = vmatpush1.msra.mxu0 %v170
    %217 = vmatprep.subr.mxu0 %v174
    %218 = vmatpush1.msra.mxu0 %v173
    %219 = vmatprep.subr.mxu0 %v177
    %220 = vmatpush1.msra.mxu0 %v176
    %221 = vmatprep.subr.mxu0 %v180
    %222 = vmatpush1.msra.mxu0 %v179
    %223 = vmatprep.subr.mxu0 %v183
    %224 = vmatpush1.msra.mxu0 %v182
    %225 = vmatprep.subr.mxu0 %v186
    %226 = vmatpush1.msra.mxu0 %v185
    %227 = vmatprep.subr.mxu0 %v189
    %228 = vmatpush1.msra.mxu0 %v188
    %229 = vmatprep.subr.mxu0 %v192
    %230 = vmatpush1.msra.mxu0 %v191
    %231 = vmatprep.subr.mxu0 %v195
    %232 = vmatpush1.msra.mxu0 %v194
    %233 = vmatprep.subr.mxu0 %v198
    %234 = vmatpush1.msra.mxu0 %v197
    %235 = vmatprep.subr.mxu0 %v201
    %236 = vmatpush1.msra.mxu0 %v200
    %237 = vmatprep.subr.mxu0 %v204
    %238 = vmatpush1.msra.mxu0 %v203
    %239 = vmatprep.subr.mxu0 %v207
    %240 = vmatpush1.msra.mxu0 %v206
    %241 = vmatprep.subr.mxu0 0.0
    %242 = vmatpush1.msra.mxu0 0.0
    %243 = vmatprep.subr.mxu0 0.0
    %244 = vmatpush1.msra.mxu0 0.0
    %245 = vmatprep.subr.mxu0 0.0
    %246 = vmatpush1.msra.mxu0 0.0
    %247 = vmatprep.subr.mxu0 0.0
    %248 = vmatpush1.msra.mxu0 0.0
    %249 = vmatprep.subr.mxu0 0.0
    %250 = vmatpush1.msra.mxu0 0.0
    %251 = vmatprep.subr.mxu0 0.0
    %252 = vmatpush1.msra.mxu0 0.0
    %253 = vmatprep.subr.mxu0 0.0
    %254 = vmatpush1.msra.mxu0 0.0
    %255 = vmatprep.subr.mxu0 0.0
    %256 = vmatpush1.msra.mxu0 0.0
    %257 = vmatprep.subr.mxu0 0.0
    %258 = vmatpush1.msra.mxu0 0.0
    %259 = vmatprep.subr.mxu0 0.0
    %260 = vmatpush1.msra.mxu0 0.0
    %261 = vmatprep.subr.mxu0 0.0
    %262 = vmatpush1.msra.mxu0 0.0
    %263 = vmatprep.subr.mxu0 0.0
    %264 = vmatpush1.msra.mxu0 0.0
    %265 = vmatprep.subr.mxu0 0.0
    %266 = vmatpush1.msra.mxu0 0.0
    %267 = vmatprep.subr.mxu0 0.0
    %268 = vmatpush1.msra.mxu0 0.0
    %269 = vmatprep.subr.mxu0 0.0
    %270 = vmatpush1.msra.mxu0 0.0
    %271 = vmatprep.subr.mxu0 0.0
    %272 = vmatpush1.msra.mxu0 0.0
    %273 = vmatprep.mubr.f32.mxu0 0.0
    %274 = vmatmul.mubr.f32.gmra.mrb[0].mxu0 %v111
    %v275 = vpop.f32.mrb[0].mxu0
    %v276 = vadd.f32 0.0, %v275
    %v277 = vpop.f32.mrb[0].mxu0
    %v278 = vadd.f32 0.0, %v277
    %279 = vdwg.mxu0
    %280 = vmatprep.subr.mxu0 0.0
    %281 = vmatpush1.msra.mxu0 %v163
    %282 = vmatprep.subr.mxu0 0.0
    %283 = vmatpush1.msra.mxu0 %v166
    %284 = vmatprep.subr.mxu0 0.0
    %285 = vmatpush1.msra.mxu0 %v169
    %286 = vmatprep.subr.mxu0 0.0
    %287 = vmatpush1.msra.mxu0 %v172
    %288 = vmatprep.subr.mxu0 0.0
    %289 = vmatpush1.msra.mxu0 %v175
    %290 = vmatprep.subr.mxu0 0.0
    %291 = vmatpush1.msra.mxu0 %v178
    %292 = vmatprep.subr.mxu0 0.0
    %293 = vmatpush1.msra.mxu0 %v181
    %294 = vmatprep.subr.mxu0 0.0
    %295 = vmatpush1.msra.mxu0 %v184
    %296 = vmatprep.subr.mxu0 0.0
    %297 = vmatpush1.msra.mxu0 %v187
    %298 = vmatprep.subr.mxu0 0.0
    %299 = vmatpush1.msra.mxu0 %v190
    %300 = vmatprep.subr.mxu0 0.0
    %301 = vmatpush1.msra.mxu0 %v193
    %302 = vmatprep.subr.mxu0 0.0
    %303 = vmatpush1.msra.mxu0 %v196
    %304 = vmatprep.subr.mxu0 0.0
    %305 = vmatpush1.msra.mxu0 %v199
    %306 = vmatprep.subr.mxu0 0.0
    %307 = vmatpush1.msra.mxu0 %v202
    %308 = vmatprep.subr.mxu0 0.0
    %309 = vmatpush1.msra.mxu0 %v205
    %310 = vmatprep.subr.mxu0 0.0
    %311 = vmatpush1.msra.mxu0 %v208
    %312 = vmatprep.subr.mxu0 0.0
    %313 = vmatpush1.msra.mxu0 0.0
    %314 = vmatprep.subr.mxu0 0.0
    %315 = vmatpush1.msra.mxu0 0.0
    %316 = vmatprep.subr.mxu0 0.0
    %317 = vmatpush1.msra.mxu0 0.0
    %318 = vmatprep.subr.mxu0 0.0
    %319 = vmatpush1.msra.mxu0 0.0
    %320 = vmatprep.subr.mxu0 0.0
    %321 = vmatpush1.msra.mxu0 0.0
    %322 = vmatprep.subr.mxu0 0.0
    %323 = vmatpush1.msra.mxu0 0.0
    %324 = vmatprep.subr.mxu0 0.0
    %325 = vmatpush1.msra.mxu0 0.0
    %326 = vmatprep.subr.mxu0 0.0
    %327 = vmatpush1.msra.mxu0 0.0
    %328 = vmatprep.subr.mxu0 0.0
    %329 = vmatpush1.msra.mxu0 0.0
    %330 = vmatprep.subr.mxu0 0.0
    %331 = vmatpush1.msra.mxu0 0.0
    %332 = vmatprep.subr.mxu0 0.0
    %333 = vmatpush1.msra.mxu0 0.0
    %334 = vmatprep.subr.mxu0 0.0
    %335 = vmatpush1.msra.mxu0 0.0
    %336 = vmatprep.subr.mxu0 0.0
    %337 = vmatpush1.msra.mxu0 0.0
    %338 = vmatprep.subr.mxu0 0.0
    %339 = vmatpush1.msra.mxu0 0.0
    %340 = vmatprep.subr.mxu0 0.0
    %341 = vmatpush1.msra.mxu0 0.0
    %342 = vmatprep.subr.mxu0 0.0
    %343 = vmatpush1.msra.mxu0 0.0
    %344 = vmatprep.mubr.f32.mxu0 0.0
    %345 = vmatmul.mubr.f32.gmra.mrb[0].mxu0 %v111
    %v346 = vpop.f32.mrb[0].mxu0
    %v347 = vadd.f32 0.0, %v346
    %v348 = vpop.f32.mrb[0].mxu0
    %349 = vdwg.mxu0
    %350 = vmatprep.subr.mxu0 %v114
    %351 = vmatpush1.msra.mxu0 %v113
    %352 = vmatprep.subr.mxu0 %v117
    %353 = vmatpush1.msra.mxu0 %v116
    %354 = vmatprep.subr.mxu0 %v120
    %355 = vmatpush1.msra.mxu0 %v119
    %356 = vmatprep.subr.mxu0 %v123
    %357 = vmatpush1.msra.mxu0 %v122
    %358 = vmatprep.subr.mxu0 %v126
    %359 = vmatpush1.msra.mxu0 %v125
    %360 = vmatprep.subr.mxu0 %v129
    %361 = vmatpush1.msra.mxu0 %v128
    %362 = vmatprep.subr.mxu0 %v132
    %363 = vmatpush1.msra.mxu0 %v131
    %364 = vmatprep.subr.mxu0 %v135
    %365 = vmatpush1.msra.mxu0 %v134
    %366 = vmatprep.subr.mxu0 %v138
    %367 = vmatpush1.msra.mxu0 %v137
    %368 = vmatprep.subr.mxu0 %v141
    %369 = vmatpush1.msra.mxu0 %v140
    %370 = vmatprep.subr.mxu0 %v144
    %371 = vmatpush1.msra.mxu0 %v143
    %372 = vmatprep.subr.mxu0 %v147
    %373 = vmatpush1.msra.mxu0 %v146
    %374 = vmatprep.subr.mxu0 %v150
    %375 = vmatpush1.msra.mxu0 %v149
    %376 = vmatprep.subr.mxu0 %v153
    %377 = vmatpush1.msra.mxu0 %v152
    %378 = vmatprep.subr.mxu0 %v156
    %379 = vmatpush1.msra.mxu0 %v155
    %380 = vmatprep.subr.mxu0 %v159
    %381 = vmatpush1.msra.mxu0 %v158
    %382 = vmatprep.subr.mxu0 0.0
    %383 = vmatpush1.msra.mxu0 0.0
    %384 = vmatprep.subr.mxu0 0.0
    %385 = vmatpush1.msra.mxu0 0.0
    %386 = vmatprep.subr.mxu0 0.0
    %387 = vmatpush1.msra.mxu0 0.0
    %388 = vmatprep.subr.mxu0 0.0
    %389 = vmatpush1.msra.mxu0 0.0
    %390 = vmatprep.subr.mxu0 0.0
    %391 = vmatpush1.msra.mxu0 0.0
    %392 = vmatprep.subr.mxu0 0.0
    %393 = vmatpush1.msra.mxu0 0.0
    %394 = vmatprep.subr.mxu0 0.0
    %395 = vmatpush1.msra.mxu0 0.0
    %396 = vmatprep.subr.mxu0 0.0
    %397 = vmatpush1.msra.mxu0 0.0
    %398 = vmatprep.subr.mxu0 0.0
    %399 = vmatpush1.msra.mxu0 0.0
    %400 = vmatprep.subr.mxu0 0.0
    %401 = vmatpush1.msra.mxu0 0.0
    %402 = vmatprep.subr.mxu0 0.0
    %403 = vmatpush1.msra.mxu0 0.0
    %404 = vmatprep.subr.mxu0 0.0
    %405 = vmatpush1.msra.mxu0 0.0
    %406 = vmatprep.subr.mxu0 0.0
    %407 = vmatpush1.msra.mxu0 0.0
    %408 = vmatprep.subr.mxu0 0.0
    %409 = vmatpush1.msra.mxu0 0.0
    %410 = vmatprep.subr.mxu0 0.0
    %411 = vmatpush1.msra.mxu0 0.0
    %412 = vmatprep.subr.mxu0 0.0
    %413 = vmatpush1.msra.mxu0 0.0
    %414 = vmatprep.mubr.f32.mxu0 0.0
    %415 = vmatmul.mubr.f32.gmra.mrb[0].mxu0 %v110
    %v416 = vpop.f32.mrb[0].mxu0
    %v417 = vadd.f32 %v276, %v416
    %v418 = vpop.f32.mrb[0].mxu0
    %v419 = vadd.f32 %v278, %v418
    %420 = vdwg.mxu0
    %421 = vmatprep.subr.mxu0 0.0
    %422 = vmatpush1.msra.mxu0 %v115
    %423 = vmatprep.subr.mxu0 0.0
    %424 = vmatpush1.msra.mxu0 %v118
    %425 = vmatprep.subr.mxu0 0.0
    %426 = vmatpush1.msra.mxu0 %v121
    %427 = vmatprep.subr.mxu0 0.0
    %428 = vmatpush1.msra.mxu0 %v124
    %429 = vmatprep.subr.mxu0 0.0
    %430 = vmatpush1.msra.mxu0 %v127
    %431 = vmatprep.subr.mxu0 0.0
    %432 = vmatpush1.msra.mxu0 %v130
    %433 = vmatprep.subr.mxu0 0.0
    %434 = vmatpush1.msra.mxu0 %v133
    %435 = vmatprep.subr.mxu0 0.0
    %436 = vmatpush1.msra.mxu0 %v136
    %437 = vmatprep.subr.mxu0 0.0
    %438 = vmatpush1.msra.mxu0 %v139
    %439 = vmatprep.subr.mxu0 0.0
    %440 = vmatpush1.msra.mxu0 %v142
    %441 = vmatprep.subr.mxu0 0.0
    %442 = vmatpush1.msra.mxu0 %v145
    %443 = vmatprep.subr.mxu0 0.0
    %444 = vmatpush1.msra.mxu0 %v148
    %445 = vmatprep.subr.mxu0 0.0
    %446 = vmatpush1.msra.mxu0 %v151
    %447 = vmatprep.subr.mxu0 0.0
    %448 = vmatpush1.msra.mxu0 %v154
    %449 = vmatprep.subr.mxu0 0.0
    %450 = vmatpush1.msra.mxu0 %v157
    %451 = vmatprep.subr.mxu0 0.0
    %452 = vmatpush1.msra.mxu0 %v160
    %453 = vmatprep.subr.mxu0 0.0
    %454 = vmatpush1.msra.mxu0 0.0
    %455 = vmatprep.subr.mxu0 0.0
    %456 = vmatpush1.msra.mxu0 0.0
    %457 = vmatprep.subr.mxu0 0.0
    %458 = vmatpush1.msra.mxu0 0.0
    %459 = vmatprep.subr.mxu0 0.0
    %460 = vmatpush1.msra.mxu0 0.0
    %461 = vmatprep.subr.mxu0 0.0
    %462 = vmatpush1.msra.mxu0 0.0
    %463 = vmatprep.subr.mxu0 0.0
    %464 = vmatpush1.msra.mxu0 0.0
    %465 = vmatprep.subr.mxu0 0.0
    %466 = vmatpush1.msra.mxu0 0.0
    %467 = vmatprep.subr.mxu0 0.0
    %468 = vmatpush1.msra.mxu0 0.0
    %469 = vmatprep.subr.mxu0 0.0
    %470 = vmatpush1.msra.mxu0 0.0
    %471 = vmatprep.subr.mxu0 0.0
    %472 = vmatpush1.msra.mxu0 0.0
    %473 = vmatprep.subr.mxu0 0.0
    %474 = vmatpush1.msra.mxu0 0.0
    %475 = vmatprep.subr.mxu0 0.0
    %476 = vmatpush1.msra.mxu0 0.0
    %477 = vmatprep.subr.mxu0 0.0
    %478 = vmatpush1.msra.mxu0 0.0
    %479 = vmatprep.subr.mxu0 0.0
    %480 = vmatpush1.msra.mxu0 0.0
    %481 = vmatprep.subr.mxu0 0.0
    %482 = vmatpush1.msra.mxu0 0.0
    %483 = vmatprep.subr.mxu0 0.0
    %484 = vmatpush1.msra.mxu0 0.0
    %485 = vmatprep.mubr.f32.mxu0 0.0
    %486 = vmatmul.mubr.f32.gmra.mrb[0].mxu0 %v110
    %v487 = vpop.f32.mrb[0].mxu0
    %v488 = vadd.f32 %v347, %v487
    %v489 = vpop.f32.mrb[0].mxu0
    %490 = vdwg.mxu0
    %v491 = vld [vmem:[#allocation8 + $0x300] sm:$0xff]
    %v492 = vld [vmem:[#allocation8 + $0x308] sm:$0xff]
    %v493 = vld [vmem:[#allocation8 + $0x310] sm:$0xff]
    %v494 = vld [vmem:[#allocation8 + $0x318] sm:$0xff]
    %v495 = vld [vmem:[#allocation8 + $0x320] sm:$0xff]
    %v496 = vld [vmem:[#allocation8 + $0x328] sm:$0xff]
    %v497 = vld [vmem:[#allocation8 + $0x330] sm:$0xff]
    %v498 = vld [vmem:[#allocation8 + $0x338] sm:$0xff]
    %v499 = vld [vmem:[#allocation8 + $0x340] sm:$0xff]
    %v500 = vld [vmem:[#allocation8 + $0x348] sm:$0xff]
    %v501 = vld [vmem:[#allocation8 + $0x350] sm:$0xff]
    %v502 = vld [vmem:[#allocation8 + $0x358] sm:$0xff]
    %v503 = vld [vmem:[#allocation8 + $0x360] sm:$0xff]
    %v504 = vld [vmem:[#allocation8 + $0x368] sm:$0xff]
    %v505 = vld [vmem:[#allocation8 + $0x370] sm:$0xff]
    %v506 = vld [vmem:[#allocation8 + $0x378] sm:$0xff]
    %v507 = vld [vmem:[#allocation8 + $0x380] sm:$0xff]
    %v508 = vld [vmem:[#allocation8 + $0x388] sm:$0xff]
    %v509 = vld [vmem:[#allocation8 + $0x390] sm:$0xff]
    %v510 = vld [vmem:[#allocation8 + $0x398] sm:$0xff]
    %v511 = vld [vmem:[#allocation8 + $0x3a0] sm:$0xff]
    %v512 = vld [vmem:[#allocation8 + $0x3a8] sm:$0xff]
    %v513 = vld [vmem:[#allocation8 + $0x3b0] sm:$0xff]
    %v514 = vld [vmem:[#allocation8 + $0x3b8] sm:$0xff]
    %v515 = vld [vmem:[#allocation8 + $0x3c0] sm:$0xff]
    %v516 = vld [vmem:[#allocation8 + $0x3c8] sm:$0xff]
    %v517 = vld [vmem:[#allocation8 + $0x3d0] sm:$0xff]
    %v518 = vld [vmem:[#allocation8 + $0x3d8] sm:$0xff]
    %v519 = vld [vmem:[#allocation8 + $0x3e0] sm:$0xff]
    %v520 = vld [vmem:[#allocation8 + $0x3e8] sm:$0xff]
    %v521 = vld [vmem:[#allocation8 + $0x3f0] sm:$0xff]
    %v522 = vld [vmem:[#allocation8 + $0x3f8] sm:$0xff]
    %v523 = vld [vmem:[#allocation8 + $0x400] sm:$0xff]
    %v524 = vld [vmem:[#allocation8 + $0x408] sm:$0xff]
    %v525 = vld [vmem:[#allocation8 + $0x410] sm:$0xff]
    %v526 = vld [vmem:[#allocation8 + $0x418] sm:$0xff]
    %v527 = vld [vmem:[#allocation8 + $0x420] sm:$0xff]
    %v528 = vld [vmem:[#allocation8 + $0x428] sm:$0xff]
    %v529 = vld [vmem:[#allocation8 + $0x430] sm:$0xff]
    %v530 = vld [vmem:[#allocation8 + $0x438] sm:$0xff]
    %v531 = vld [vmem:[#allocation8 + $0x440] sm:$0xff]
    %v532 = vld [vmem:[#allocation8 + $0x448] sm:$0xff]
    %v533 = vld [vmem:[#allocation8 + $0x450] sm:$0xff]
    %v534 = vld [vmem:[#allocation8 + $0x458] sm:$0xff]
    %v535 = vld [vmem:[#allocation8 + $0x460] sm:$0xff]
    %v536 = vld [vmem:[#allocation8 + $0x468] sm:$0xff]
    %v537 = vld [vmem:[#allocation8 + $0x470] sm:$0xff]
    %v538 = vld [vmem:[#allocation8 + $0x478] sm:$0xff]
    %539 = vmatprep.subr.mxu0 %v492
    %540 = vmatpush1.msra.mxu0 %v491
    %541 = vmatprep.subr.mxu0 %v495
    %542 = vmatpush1.msra.mxu0 %v494
    %543 = vmatprep.subr.mxu0 %v498
    %544 = vmatpush1.msra.mxu0 %v497
    %545 = vmatprep.subr.mxu0 %v501
    %546 = vmatpush1.msra.mxu0 %v500
    %547 = vmatprep.subr.mxu0 %v504
    %548 = vmatpush1.msra.mxu0 %v503
    %549 = vmatprep.subr.mxu0 %v507
    %550 = vmatpush1.msra.mxu0 %v506
    %551 = vmatprep.subr.mxu0 %v510
    %552 = vmatpush1.msra.mxu0 %v509
    %553 = vmatprep.subr.mxu0 %v513
    %554 = vmatpush1.msra.mxu0 %v512
    %555 = vmatprep.subr.mxu0 %v516
    %556 = vmatpush1.msra.mxu0 %v515
    %557 = vmatprep.subr.mxu0 %v519
    %558 = vmatpush1.msra.mxu0 %v518
    %559 = vmatprep.subr.mxu0 %v522
    %560 = vmatpush1.msra.mxu0 %v521
    %561 = vmatprep.subr.mxu0 %v525
    %562 = vmatpush1.msra.mxu0 %v524
    %563 = vmatprep.subr.mxu0 %v528
    %564 = vmatpush1.msra.mxu0 %v527
    %565 = vmatprep.subr.mxu0 %v531
    %566 = vmatpush1.msra.mxu0 %v530
    %567 = vmatprep.subr.mxu0 %v534
    %568 = vmatpush1.msra.mxu0 %v533
    %569 = vmatprep.subr.mxu0 %v537
    %570 = vmatpush1.msra.mxu0 %v536
    %571 = vmatprep.subr.mxu0 0.0
    %572 = vmatpush1.msra.mxu0 0.0
    %573 = vmatprep.subr.mxu0 0.0
    %574 = vmatpush1.msra.mxu0 0.0
    %575 = vmatprep.subr.mxu0 0.0
    %576 = vmatpush1.msra.mxu0 0.0
    %577 = vmatprep.subr.mxu0 0.0
    %578 = vmatpush1.msra.mxu0 0.0
    %579 = vmatprep.subr.mxu0 0.0
    %580 = vmatpush1.msra.mxu0 0.0
    %581 = vmatprep.subr.mxu0 0.0
    %582 = vmatpush1.msra.mxu0 0.0
    %583 = vmatprep.subr.mxu0 0.0
    %584 = vmatpush1.msra.mxu0 0.0
    %585 = vmatprep.subr.mxu0 0.0
    %586 = vmatpush1.msra.mxu0 0.0
    %587 = vmatprep.subr.mxu0 0.0
    %588 = vmatpush1.msra.mxu0 0.0
    %589 = vmatprep.subr.mxu0 0.0
    %590 = vmatpush1.msra.mxu0 0.0
    %591 = vmatprep.subr.mxu0 0.0
    %592 = vmatpush1.msra.mxu0 0.0
    %593 = vmatprep.subr.mxu0 0.0
    %594 = vmatpush1.msra.mxu0 0.0
    %595 = vmatprep.subr.mxu0 0.0
    %596 = vmatpush1.msra.mxu0 0.0
    %597 = vmatprep.subr.mxu0 0.0
    %598 = vmatpush1.msra.mxu0 0.0
    %599 = vmatprep.subr.mxu0 0.0
    %600 = vmatpush1.msra.mxu0 0.0
    %601 = vmatprep.subr.mxu0 0.0
    %602 = vmatpush1.msra.mxu0 0.0
    %603 = vmatprep.mubr.f32.mxu0 0.0
    %604 = vmatmul.mubr.f32.gmra.mrb[0].mxu0 %v112
    %v605 = vpop.f32.mrb[0].mxu0
    %v606 = vadd.f32 0.0, %v605
    %v607 = vpop.f32.mrb[0].mxu0
    %v608 = vadd.f32 0.0, %v607
    %609 = vdwg.mxu0
    %610 = vmatprep.subr.mxu0 0.0
    %611 = vmatpush1.msra.mxu0 %v493
    %612 = vmatprep.subr.mxu0 0.0
    %613 = vmatpush1.msra.mxu0 %v496
    %614 = vmatprep.subr.mxu0 0.0
    %615 = vmatpush1.msra.mxu0 %v499
    %616 = vmatprep.subr.mxu0 0.0
    %617 = vmatpush1.msra.mxu0 %v502
    %618 = vmatprep.subr.mxu0 0.0
    %619 = vmatpush1.msra.mxu0 %v505
    %620 = vmatprep.subr.mxu0 0.0
    %621 = vmatpush1.msra.mxu0 %v508
    %622 = vmatprep.subr.mxu0 0.0
    %623 = vmatpush1.msra.mxu0 %v511
    %624 = vmatprep.subr.mxu0 0.0
    %625 = vmatpush1.msra.mxu0 %v514
    %626 = vmatprep.subr.mxu0 0.0
    %627 = vmatpush1.msra.mxu0 %v517
    %628 = vmatprep.subr.mxu0 0.0
    %629 = vmatpush1.msra.mxu0 %v520
    %630 = vmatprep.subr.mxu0 0.0
    %631 = vmatpush1.msra.mxu0 %v523
    %632 = vmatprep.subr.mxu0 0.0
    %633 = vmatpush1.msra.mxu0 %v526
    %634 = vmatprep.subr.mxu0 0.0
    %635 = vmatpush1.msra.mxu0 %v529
    %636 = vmatprep.subr.mxu0 0.0
    %637 = vmatpush1.msra.mxu0 %v532
    %638 = vmatprep.subr.mxu0 0.0
    %639 = vmatpush1.msra.mxu0 %v535
    %640 = vmatprep.subr.mxu0 0.0
    %641 = vmatpush1.msra.mxu0 %v538
    %642 = vmatprep.subr.mxu0 0.0
    %643 = vmatpush1.msra.mxu0 0.0
    %644 = vmatprep.subr.mxu0 0.0
    %645 = vmatpush1.msra.mxu0 0.0
    %646 = vmatprep.subr.mxu0 0.0
    %647 = vmatpush1.msra.mxu0 0.0
    %648 = vmatprep.subr.mxu0 0.0
    %649 = vmatpush1.msra.mxu0 0.0
    %650 = vmatprep.subr.mxu0 0.0
    %651 = vmatpush1.msra.mxu0 0.0
    %652 = vmatprep.subr.mxu0 0.0
    %653 = vmatpush1.msra.mxu0 0.0
    %654 = vmatprep.subr.mxu0 0.0
    %655 = vmatpush1.msra.mxu0 0.0
    %656 = vmatprep.subr.mxu0 0.0
    %657 = vmatpush1.msra.mxu0 0.0
    %658 = vmatprep.subr.mxu0 0.0
    %659 = vmatpush1.msra.mxu0 0.0
    %660 = vmatprep.subr.mxu0 0.0
    %661 = vmatpush1.msra.mxu0 0.0
    %662 = vmatprep.subr.mxu0 0.0
    %663 = vmatpush1.msra.mxu0 0.0
    %664 = vmatprep.subr.mxu0 0.0
    %665 = vmatpush1.msra.mxu0 0.0
    %666 = vmatprep.subr.mxu0 0.0
    %667 = vmatpush1.msra.mxu0 0.0
    %668 = vmatprep.subr.mxu0 0.0
    %669 = vmatpush1.msra.mxu0 0.0
    %670 = vmatprep.subr.mxu0 0.0
    %671 = vmatpush1.msra.mxu0 0.0
    %672 = vmatprep.subr.mxu0 0.0
    %673 = vmatpush1.msra.mxu0 0.0
    %674 = vmatprep.mubr.f32.mxu0 0.0
    %675 = vmatmul.mubr.f32.gmra.mrb[0].mxu0 %v112
    %v676 = vpop.f32.mrb[0].mxu0
    %v677 = vadd.f32 0.0, %v676
    %v678 = vpop.f32.mrb[0].mxu0
    %679 = vdwg.mxu0
    %v680 = vadd.f32 %v417, %v606
    %v681 = vadd.f32 %v419, %v608
    %v682 = vadd.f32 %v488, %v677
    %v683 = vld [vmem:[%s6] sm:$0x7]
    %v685 = vlaneseq
    %v686 = vshrl.u32 %v685, 7
    %v687 = vsub.s32 0, %v686
    %v688 = vrot.slane %v683, %v687
    %v689 = vlaneseq
    %v690 = vshrl.u32 %v689, 7
    %v691 = vsub.s32 1, %v690
    %v692 = vrot.slane %v683, %v691
    %v693 = vlaneseq
    %v694 = vshrl.u32 %v693, 7
    %v695 = vsub.s32 2, %v694
    %v696 = vrot.slane %v683, %v695
    %v700 = vadd.f32 %v680, %v688
    %v701 = vadd.f32 %v681, %v692
    %v702 = vadd.f32 %v682, %v696
    %v703 = vld [vmem:[#allocation10] sm:$0xff]
    %v704 = vld [vmem:[#allocation10 + $0x8] sm:$0xff]
    %v705 = vld [vmem:[#allocation10 + $0x10] sm:$0xff]
    %v706 = vld [vmem:[#allocation10 + $0x18] sm:$0xff]
    %v707 = vld [vmem:[#allocation10 + $0x20] sm:$0xff]
    %v708 = vld [vmem:[#allocation10 + $0x28] sm:$0xff]
    %v709 = vld [vmem:[#allocation10 + $0x30] sm:$0xff]
    %v710 = vld [vmem:[#allocation10 + $0x38] sm:$0xff]
    %v711 = vld [vmem:[#allocation10 + $0x40] sm:$0xff]
    %v712 = vld [vmem:[#allocation10 + $0x48] sm:$0xff]
    %v713 = vld [vmem:[#allocation10 + $0x50] sm:$0xff]
    %v714 = vld [vmem:[#allocation10 + $0x58] sm:$0xff]
    %v715 = vld [vmem:[#allocation10 + $0x60] sm:$0xff]
    %v716 = vld [vmem:[#allocation10 + $0x68] sm:$0xff]
    %v717 = vld [vmem:[#allocation10 + $0x70] sm:$0xff]
    %v718 = vld [vmem:[#allocation10 + $0x78] sm:$0xff]
    %v719 = vld [vmem:[%s7] sm:$0x1]
    %v721 = vlaneseq
    %v722 = vshrl.u32 %v721, 7
    %v723 = vsub.s32 0, %v722
    %v724 = vrot.slane %v719, %v723
    %726 = vmatprep.subr.mxu0 0.0
    %727 = vmatpush1.msra.mxu0 %v703
    %728 = vmatprep.subr.mxu0 0.0
    %729 = vmatpush1.msra.mxu0 %v704
    %730 = vmatprep.subr.mxu0 0.0
    %731 = vmatpush1.msra.mxu0 %v705
    %732 = vmatprep.subr.mxu0 0.0
    %733 = vmatpush1.msra.mxu0 %v706
    %734 = vmatprep.subr.mxu0 0.0
    %735 = vmatpush1.msra.mxu0 %v707
    %736 = vmatprep.subr.mxu0 0.0
    %737 = vmatpush1.msra.mxu0 %v708
    %738 = vmatprep.subr.mxu0 0.0
    %739 = vmatpush1.msra.mxu0 %v709
    %740 = vmatprep.subr.mxu0 0.0
    %741 = vmatpush1.msra.mxu0 %v710
    %742 = vmatprep.subr.mxu0 0.0
    %743 = vmatpush1.msra.mxu0 %v711
    %744 = vmatprep.subr.mxu0 0.0
    %745 = vmatpush1.msra.mxu0 %v712
    %746 = vmatprep.subr.mxu0 0.0
    %747 = vmatpush1.msra.mxu0 %v713
    %748 = vmatprep.subr.mxu0 0.0
    %749 = vmatpush1.msra.mxu0 %v714
    %750 = vmatprep.subr.mxu0 0.0
    %751 = vmatpush1.msra.mxu0 %v715
    %752 = vmatprep.subr.mxu0 0.0
    %753 = vmatpush1.msra.mxu0 %v716
    %754 = vmatprep.subr.mxu0 0.0
    %755 = vmatpush1.msra.mxu0 %v717
    %756 = vmatprep.subr.mxu0 0.0
    %757 = vmatpush1.msra.mxu0 %v718
    %758 = vmatprep.subr.mxu0 0.0
    %759 = vmatpush1.msra.mxu0 0.0
    %760 = vmatprep.subr.mxu0 0.0
    %761 = vmatpush1.msra.mxu0 0.0
    %762 = vmatprep.subr.mxu0 0.0
    %763 = vmatpush1.msra.mxu0 0.0
    %764 = vmatprep.subr.mxu0 0.0
    %765 = vmatpush1.msra.mxu0 0.0
    %766 = vmatprep.subr.mxu0 0.0
    %767 = vmatpush1.msra.mxu0 0.0
    %768 = vmatprep.subr.mxu0 0.0
    %769 = vmatpush1.msra.mxu0 0.0
    %770 = vmatprep.subr.mxu0 0.0
    %771 = vmatpush1.msra.mxu0 0.0
    %772 = vmatprep.subr.mxu0 0.0
    %773 = vmatpush1.msra.mxu0 0.0
    %774 = vmatprep.subr.mxu0 0.0
    %775 = vmatpush1.msra.mxu0 0.0
    %776 = vmatprep.subr.mxu0 0.0
    %777 = vmatpush1.msra.mxu0 0.0
    %778 = vmatprep.subr.mxu0 0.0
    %779 = vmatpush1.msra.mxu0 0.0
    %780 = vmatprep.subr.mxu0 0.0
    %781 = vmatpush1.msra.mxu0 0.0
    %782 = vmatprep.subr.mxu0 0.0
    %783 = vmatpush1.msra.mxu0 0.0
    %784 = vmatprep.subr.mxu0 0.0
    %785 = vmatpush1.msra.mxu0 0.0
    %786 = vmatprep.subr.mxu0 0.0
    %787 = vmatpush1.msra.mxu0 0.0
    %788 = vmatprep.subr.mxu0 0.0
    %789 = vmatpush1.msra.mxu0 0.0
    %790 = vmatprep.mubr.f32.mxu0 0.0
    %791 = vmatmul.mubr.f32.gmra.mrb[0].mxu0 %v111
    %v792 = vpop.f32.mrb[0].mxu0
    %v793 = vadd.f32 %v724, %v792
    %v794 = vpop.f32.mrb[0].mxu0
    %795 = vdwg.mxu0
    %v796 = vxor.u32 %v700, 2147483648
    %v797 = vmul.f32 %v796, 1.442695
    %v798 = vpow.pop %v797
    %v799 = vadd.f32 %v798, 1.0
    %v800 = vrcp.pop %v799
    %v801 = vmul.f32 1.0, %v800
    %v802 = vxor.u32 %v701, 2147483648
    %v803 = vmul.f32 %v802, 1.442695
    %v804 = vpow.pop %v803
    %v805 = vadd.f32 %v804, 1.0
    %v806 = vrcp.pop %v805
    %v807 = vmul.f32 1.0, %v806
    %v808 = vxor.u32 %v702, 2147483648
    %v809 = vmul.f32 %v808, 1.442695
    %v810 = vpow.pop %v809
    %v811 = vadd.f32 %v810, 1.0
    %v812 = vrcp.pop %v811
    %v813 = vmul.f32 1.0, %v812
    %v814 = vtanh.pop %v793
    %s815 = sshra.s32 %s109, 7
    %s816 = sand.u32 %s109, 127
    %s817 = scalar_lea.vmem [#allocation7], %s815
    %v818 = vld [vmem:[%s817] sm:$0xff]
    %v819 = vmul.f32 %v807, %v818
    %v820 = vmul.f32 %v801, %v814
    %v821 = vadd.f32 %v819, %v820
    %v822 = vtanh.pop %v821
    %v823 = vld [vmem:[#allocation11] sm:$0xff]
    %v824 = vld [vmem:[#allocation11 + $0x8] sm:$0xff]
    %v825 = vld [vmem:[#allocation11 + $0x10] sm:$0xff]
    %v826 = vld [vmem:[#allocation11 + $0x18] sm:$0xff]
    %v827 = vld [vmem:[#allocation11 + $0x20] sm:$0xff]
    %v828 = vld [vmem:[#allocation11 + $0x28] sm:$0xff]
    %v829 = vld [vmem:[#allocation11 + $0x30] sm:$0xff]
    %v830 = vld [vmem:[#allocation11 + $0x38] sm:$0xff]
    %v831 = vld [vmem:[#allocation11 + $0x40] sm:$0xff]
    %v832 = vld [vmem:[#allocation11 + $0x48] sm:$0xff]
    %v833 = vld [vmem:[#allocation11 + $0x50] sm:$0xff]
    %v834 = vld [vmem:[#allocation11 + $0x58] sm:$0xff]
    %v835 = vld [vmem:[#allocation11 + $0x60] sm:$0xff]
    %v836 = vld [vmem:[#allocation11 + $0x68] sm:$0xff]
    %v837 = vld [vmem:[#allocation11 + $0x70] sm:$0xff]
    %v838 = vld [vmem:[#allocation11 + $0x78] sm:$0xff]
    %839 = vmatprep.subr.mxu0 0.0
    %840 = vmatpush1.msra.mxu0 %v823
    %841 = vmatprep.subr.mxu0 0.0
    %842 = vmatpush1.msra.mxu0 %v824
    %843 = vmatprep.subr.mxu0 0.0
    %844 = vmatpush1.msra.mxu0 %v825
    %845 = vmatprep.subr.mxu0 0.0
    %846 = vmatpush1.msra.mxu0 %v826
    %847 = vmatprep.subr.mxu0 0.0
    %848 = vmatpush1.msra.mxu0 %v827
    %849 = vmatprep.subr.mxu0 0.0
    %850 = vmatpush1.msra.mxu0 %v828
    %851 = vmatprep.subr.mxu0 0.0
    %852 = vmatpush1.msra.mxu0 %v829
    %853 = vmatprep.subr.mxu0 0.0
    %854 = vmatpush1.msra.mxu0 %v830
    %855 = vmatprep.subr.mxu0 0.0
    %856 = vmatpush1.msra.mxu0 %v831
    %857 = vmatprep.subr.mxu0 0.0
    %858 = vmatpush1.msra.mxu0 %v832
    %859 = vmatprep.subr.mxu0 0.0
    %860 = vmatpush1.msra.mxu0 %v833
    %861 = vmatprep.subr.mxu0 0.0
    %862 = vmatpush1.msra.mxu0 %v834
    %863 = vmatprep.subr.mxu0 0.0
    %864 = vmatpush1.msra.mxu0 %v835
    %865 = vmatprep.subr.mxu0 0.0
    %866 = vmatpush1.msra.mxu0 %v836
    %867 = vmatprep.subr.mxu0 0.0
    %868 = vmatpush1.msra.mxu0 %v837
    %869 = vmatprep.subr.mxu0 0.0
    %870 = vmatpush1.msra.mxu0 %v838
    %871 = vmatprep.subr.mxu0 0.0
    %872 = vmatpush1.msra.mxu0 0.0
    %873 = vmatprep.subr.mxu0 0.0
    %874 = vmatpush1.msra.mxu0 0.0
    %875 = vmatprep.subr.mxu0 0.0
    %876 = vmatpush1.msra.mxu0 0.0
    %877 = vmatprep.subr.mxu0 0.0
    %878 = vmatpush1.msra.mxu0 0.0
    %879 = vmatprep.subr.mxu0 0.0
    %880 = vmatpush1.msra.mxu0 0.0
    %881 = vmatprep.subr.mxu0 0.0
    %882 = vmatpush1.msra.mxu0 0.0
    %883 = vmatprep.subr.mxu0 0.0
    %884 = vmatpush1.msra.mxu0 0.0
    %885 = vmatprep.subr.mxu0 0.0
    %886 = vmatpush1.msra.mxu0 0.0
    %887 = vmatprep.subr.mxu0 0.0
    %888 = vmatpush1.msra.mxu0 0.0
    %889 = vmatprep.subr.mxu0 0.0
    %890 = vmatpush1.msra.mxu0 0.0
    %891 = vmatprep.subr.mxu0 0.0
    %892 = vmatpush1.msra.mxu0 0.0
    %893 = vmatprep.subr.mxu0 0.0
    %894 = vmatpush1.msra.mxu0 0.0
    %895 = vmatprep.subr.mxu0 0.0
    %896 = vmatpush1.msra.mxu0 0.0
    %897 = vmatprep.subr.mxu0 0.0
    %898 = vmatpush1.msra.mxu0 0.0
    %899 = vmatprep.subr.mxu0 0.0
    %900 = vmatpush1.msra.mxu0 0.0
    %901 = vmatprep.subr.mxu0 0.0
    %902 = vmatpush1.msra.mxu0 0.0
    %903 = vmatprep.mubr.f32.mxu0 0.0
    %904 = vmatmul.mubr.f32.gmra.mrb[0].mxu0 %v110
    %v905 = vpop.f32.mrb[0].mxu0
    %v906 = vadd.f32 0.0, %v905
    %v907 = vpop.f32.mrb[0].mxu0
    %908 = vdwg.mxu0
    %v909 = vadd.f32 %v822, %v906
    %v910 = vmul.f32 %v813, %v909
    %911 = vst [vmem:[#allocation13] sm:$0xff] %v910
    %912 = vst [vmem:[#allocation14] sm:$0xff] %v821
    // Predicated region
    $region58: #{tpu_custom_call.1} parent=1 // pred_check
      _
    $region59: #{tpu_custom_call.1} parent=1 // pred_check_branch
      %914 = sbr.rel (0) target = $region61
    $region60: #{tpu_custom_call.1} parent=1 // pred_region
      %s916 = ssub.s32 128, 128
      %917 = vsyncadd [#allocation4], %s916
      %s919 = sshll.u32 [#allocation13], 4
      %s920 = int_to_ptr.vmem [resolvable:$true] %s919
      %922 = dma.vmem_to_hbm [thread:$0]  %s920, 128, %s8, [#allocation4]
    $region61: #{tpu_custom_call.1} parent=1 // pred_fallthru
      _
    // Predicated region
    $region62: #{tpu_custom_call.1} parent=1 // pred_check
      _
    $region63: #{tpu_custom_call.1} parent=1 // pred_check_branch
      %924 = sbr.rel (0) target = $region65
    $region64: #{tpu_custom_call.1} parent=1 // pred_region
      %s926 = ssub.s32 128, 128
      %927 = vsyncadd [#allocation15], %s926
      %s929 = sshll.u32 [#allocation14], 4
      %s930 = int_to_ptr.vmem [resolvable:$true] %s929
      %932 = dma.vmem_to_hbm [thread:$0]  %s930, 128, %s9, [#allocation15]
    $region65: #{tpu_custom_call.1} parent=1 // pred_fallthru
      _
    // Predicated region
    $region66: #{tpu_custom_call.1} parent=1 // pred_check
      _
    $region67: #{tpu_custom_call.1} parent=1 // pred_check_branch
      %934 = sbr.rel (0) target = $region69
    $region68: #{tpu_custom_call.1} parent=1 // pred_region
      %935 = dma.done [#allocation4], 128
    $region69: #{tpu_custom_call.1} parent=1 // pred_fallthru
      _
    // Predicated region
    $region70: #{tpu_custom_call.1} parent=1 // pred_check
      _
    $region71: #{tpu_custom_call.1} parent=1 // pred_check_branch
      %937 = sbr.rel (0) target = $region73
    $region72: #{tpu_custom_call.1} parent=1 // pred_region
      %938 = dma.done [#allocation15], 128
    $region73: #{tpu_custom_call.1} parent=1 // pred_fallthru
      _
    %939 = vsyncpa [#allocation3], 1
    %940 = vsyncpa [#allocation6], 1
    %941 = vsyncpa [#allocation9], 1
    %942 = vsyncpa [#allocation12], 1
    %943 = vsyncpa [#allocation4], 1
    %944 = vsyncpa [#allocation15], 1

</llo_original>
